<compile_context>
chip_gen: v7x
topology: tpu7x:2x2x1
jax: 0.10.0
libtpu: 0.0.40
codegen_flags: <defaults>
</compile_context>

<pallas_src>
import functools

import jax
import jax.numpy as jnp
from jax import lax
from jax.experimental import pallas as pl
from jax.experimental.pallas import tpu as pltpu

LANES = 128
MAX_BLOCK_ROWS = 1024      # (1024,128) f32 tile = 512 KiB -> ~4-5 MiB total VMEM
NUM_CORES = 2              # "parallel" leading grid axis (2 TCs on v7x)
EPS = 1e-7

# Module __init__ defaults
GAMMA_LC = 0.5
GAMMA_HC = 3.0
FC = 4.0
MOMENTUM = 0.9
RUNNING_POS_WEIGHT_INIT = 1.0   # registered buffer init


def _round_up(x, d):
    return ((x + d - 1) // d) * d


def _get_xi(current_epoch, num_epochs, fc):
    if num_epochs is None:
        return 0.5
    ei, en = current_epoch, num_epochs
    if fc * ei <= en:
        return 1.0 - fc * ei / en
    return (fc * ei / en - 1.0) / (fc - 1.0)


def _fused_kernel(x_ref, y_ref, out_ref, s1_acc, s2_acc, pos_acc, neg_acc,
                  *, gamma, alpha, blocks_per_core, n_valid, needs_mask):
    c = pl.program_id(0)
    i = pl.program_id(1)

    @pl.when(i == 0)
    def _():
        s1_acc[...] = jnp.zeros_like(s1_acc)
        s2_acc[...] = jnp.zeros_like(s2_acc)
        pos_acc[...] = jnp.zeros_like(pos_acc)
        neg_acc[...] = jnp.zeros_like(neg_acc)

    x = jnp.clip(x_ref[...].astype(jnp.float32), -10.0, 10.0)   # torch.clamp
    y = y_ref[...].astype(jnp.float32)

    # softplus(-x) = -log(sigmoid(x)), PyTorch's numerically stable form.
    sp_abs = jnp.log1p(jnp.exp(-jnp.abs(x)))
    softplus_negx = sp_abs + jnp.maximum(-x, 0.0)

    # BCE-with-logits is affine in pos_weight:
    #   ce(pw) = base_ce + (pw - 1) * y * softplus(-x)
    base_ce = (1.0 - y) * x + softplus_negx
    extra_ce = y * softplus_negx

    # modulating factor (1 - pt)^gamma with pt = y*p + (1-y)*(1-p), p = sigmoid(x).
    # For binary labels 1 - pt == sigmoid(x*(1-2y)), hence
    #   mod = exp(-gamma * softplus(x*(2y-1))) = exp(-gamma*(softplus(-x) + y*x)).
    # The eps clips on p/pt are no-ops because x is clamped to [-10, 10].
    # TODO(synk): identity assumes binary labels (default no-label-smoothing path).
    mod = jnp.exp(-gamma * (softplus_negx + y * x))

    t1 = mod * base_ce           # pos_weight-independent part
    t2 = mod * extra_ce          # coefficient of (pos_weight - 1)
    if alpha is not None:
        alpha_t = alpha * y + (1.0 - alpha) * (1.0 - y)
        t1 = alpha_t * t1
        t2 = alpha_t * t2
    pos = jnp.where(y == 1.0, 1.0, 0.0)
    neg = jnp.where(y == 0.0, 1.0, 0.0)

    if needs_mask:
        br, ln = x.shape
        row = lax.broadcasted_iota(jnp.int32, (br, ln), 0)
        col = lax.broadcasted_iota(jnp.int32, (br, ln), 1)
        grow = (c * blocks_per_core + i) * br + row
        valid = (grow * ln + col) < n_valid
        zero = jnp.float32(0.0)
        t1 = jnp.where(valid, t1, zero)
        t2 = jnp.where(valid, t2, zero)
        pos = jnp.where(valid, pos, zero)
        neg = jnp.where(valid, neg, zero)

    # Elementwise VPU accumulate; no cross-lane work in the steady state.
    s1_acc[...] += t1
    s2_acc[...] += t2
    pos_acc[...] += pos
    neg_acc[...] += neg

    @pl.when(i == pl.num_programs(1) - 1)
    def _():
        out_ref[0, 0:1, :] = jnp.sum(s1_acc[...], axis=0, keepdims=True)
        out_ref[0, 1:2, :] = jnp.sum(s2_acc[...], axis=0, keepdims=True)
        out_ref[0, 2:3, :] = jnp.sum(pos_acc[...], axis=0, keepdims=True)
        out_ref[0, 3:4, :] = jnp.sum(neg_acc[...], axis=0, keepdims=True)


def cyclical_focal_loss(logits, labels, *, current_epoch=0, num_epochs=None,
                        gamma_lc=GAMMA_LC, gamma_hc=GAMMA_HC, fc=FC,
                        alpha=None, label_smoothing=None, reduction="mean",
                        running_pos_weight=RUNNING_POS_WEIGHT_INIT,
                        momentum=MOMENTUM):
    if label_smoothing is not None:
        # TODO(synk): label smoothing makes labels non-binary (needs general pt
        # path and changes the ==0/==1 counts) -- not implemented.
        raise NotImplementedError("label_smoothing is not supported")

    n = int(logits.size)
    x_dtype = logits.dtype if logits.dtype in (jnp.bfloat16, jnp.float32) else jnp.float32
    y_dtype = labels.dtype if labels.dtype in (jnp.bfloat16, jnp.float32) else jnp.float32

    m_rows = -(-n // LANES)
    rows_per_core = -(-m_rows // NUM_CORES)
    sub_align = 16 if (x_dtype == jnp.bfloat16 or y_dtype == jnp.bfloat16) else 8
    block_rows = min(MAX_BLOCK_ROWS, _round_up(rows_per_core, sub_align))
    blocks_per_core = -(-rows_per_core // block_rows)
    m_padded = NUM_CORES * blocks_per_core * block_rows
    pad = m_padded * LANES - n
    needs_mask = pad > 0

    x2 = jnp.pad(logits.reshape(-1).astype(x_dtype), (0, pad)).reshape(m_padded, LANES)
    y2 = jnp.pad(labels.reshape(-1).astype(y_dtype), (0, pad)).reshape(m_padded, LANES)

    xi = _get_xi(current_epoch, num_epochs, fc)
    current_gamma = xi * gamma_lc + (1.0 - xi) * gamma_hc   # static python float

    kernel = functools.partial(
        _fused_kernel, gamma=float(current_gamma),
        alpha=None if alpha is None else float(alpha),
        blocks_per_core=blocks_per_core, n_valid=n, needs_mask=needs_mask)

    def data_map(c, i, _bpc=blocks_per_core):
        return (c * _bpc + i, 0)

    partials = pl.pallas_call(
        kernel,
        out_shape=jax.ShapeDtypeStruct((NUM_CORES, 4, LANES), jnp.float32),
        grid=(NUM_CORES, blocks_per_core),
        in_specs=[pl.BlockSpec((block_rows, LANES), data_map),
                  pl.BlockSpec((block_rows, LANES), data_map)],
        out_specs=pl.BlockSpec((1, 4, LANES), lambda c, i: (c, 0, 0)),
        scratch_shapes=[pltpu.VMEM((block_rows, LANES), jnp.float32)
                        for _ in range(4)],
        compiler_params=pltpu.CompilerParams(
            dimension_semantics=("parallel", "arbitrary")),
    )(x2, y2)

    # ---- scalar glue (cheap, plain JAX): pos_weight EMA + affine recombination ----
    s1 = jnp.sum(partials[:, 0, :])
    s2 = jnp.sum(partials[:, 1, :])
    num_pos = jnp.sum(partials[:, 2, :])
    num_neg = jnp.sum(partials[:, 3, :])

    current_pw = jnp.where(num_pos > 0,
                           num_neg / jnp.maximum(num_pos, 1.0),
                           jnp.float32(1.0))
    current_pw = jnp.clip(current_pw, 1.0, 2.0)
    # TODO(synk): the nn.Module updates its running_pos_weight buffer in place;
    # here the EMA is computed functionally from the passed-in value.
    running_pw = momentum * running_pos_weight + (1.0 - momentum) * current_pw

    loss_sum = s1 + (running_pw - 1.0) * s2
    if reduction == "mean":
        loss = loss_sum / jnp.float32(n)
    elif reduction == "sum":
        loss = loss_sum
    else:
        # TODO(synk): reduction='none' would need a per-element output slab.
        raise NotImplementedError("reduction must be 'mean' or 'sum'")
    return loss, current_gamma


def _reference(logits, labels, *, running_pos_weight=RUNNING_POS_WEIGHT_INIT,
               momentum=MOMENTUM, gamma_lc=GAMMA_LC, gamma_hc=GAMMA_HC):
    """Pure-JAX reference mirroring the PyTorch forward exactly (defaults)."""
    x = jnp.clip(logits.astype(jnp.float32), -10.0, 10.0)
    y = labels.astype(jnp.float32)
    num_neg = jnp.sum(y == 0.0).astype(jnp.float32)
    num_pos = jnp.sum(y == 1.0).astype(jnp.float32)
    cpw = jnp.where(num_pos > 0, num_neg / jnp.maximum(num_pos, 1.0), 1.0)
    cpw = jnp.clip(cpw, 1.0, 2.0)
    pw = momentum * running_pos_weight + (1.0 - momentum) * cpw
    p = jnp.clip(jax.nn.sigmoid(x), EPS, 1.0 - EPS)
    log_weight = 1.0 + (pw - 1.0) * y
    sp = jnp.log1p(jnp.exp(-jnp.abs(x))) + jnp.maximum(-x, 0.0)
    ce = (1.0 - y) * x + log_weight * sp
    pt = jnp.clip(y * p + (1.0 - y) * (1.0 - p), EPS, 1.0)
    gamma = 0.5 * gamma_lc + 0.5 * gamma_hc
    loss = jnp.power(1.0 - pt, gamma) * ce
    return jnp.mean(loss), gamma


if __name__ == "__main__":
    key = jax.random.PRNGKey(0)
    k1, k2, k3, k4 = jax.random.split(key, 4)

    # Test 1: NCHW-style example input, f32, exact tiling.
    shape = (2, 4, 16, 16)
    logits = jax.random.normal(k1, shape, dtype=jnp.float32) * 3.0
    labels = (jax.random.uniform(k2, shape) > 0.7).astype(jnp.float32)
    loss, gamma = cyclical_focal_loss(logits, labels)
    loss = jax.block_until_ready(loss)
    ref_loss, ref_gamma = _reference(logits, labels)
    assert abs(gamma - float(ref_gamma)) < 1e-6
    assert jnp.allclose(loss, ref_loss, rtol=1e-4, atol=1e-6), (loss, ref_loss)

    # Test 2: ragged element count (exercises padding + in-kernel mask).
    shape2 = (3, 5, 17)
    logits2 = jax.random.normal(k3, shape2, dtype=jnp.float32) * 3.0
    labels2 = (jax.random.uniform(k4, shape2) > 0.6).astype(jnp.float32)
    loss2, _ = cyclical_focal_loss(logits2, labels2)
    ref2, _ = _reference(logits2, labels2)
    assert jnp.allclose(jax.block_until_ready(loss2), ref2,
                        rtol=1e-4, atol=1e-6), (loss2, ref2)

    # Test 3: bf16 inputs stay bf16 in HBM, widened to f32 inside the kernel.
    logits3 = (jax.random.normal(k1, shape, dtype=jnp.float32) * 3.0).astype(jnp.bfloat16)
    labels3 = (jax.random.uniform(k2, shape) > 0.7).astype(jnp.bfloat16)
    loss3, _ = cyclical_focal_loss(logits3, labels3)
    ref3, _ = _reference(logits3, labels3)
    assert jnp.allclose(jax.block_until_ready(loss3), ref3,
                        rtol=1e-3, atol=1e-5), (loss3, ref3)

    print("KERNEL_OK")
</pallas_src>

<mosaic_0001>
module attributes {stable_mosaic.version = 11 : i64} {
  func.func @_fused_kernel(%arg0: i32, %arg1: i32, %arg2: memref<8x128xf32, #tpu.memory_space<vmem>>, %arg3: memref<8x128xf32, #tpu.memory_space<vmem>>, %arg4: memref<1x4x128xf32, #tpu.memory_space<vmem>>, %arg5: memref<8x128xf32, #tpu.memory_space<vmem>>, %arg6: memref<8x128xf32, #tpu.memory_space<vmem>>, %arg7: memref<8x128xf32, #tpu.memory_space<vmem>>, %arg8: memref<8x128xf32, #tpu.memory_space<vmem>>) attributes {dimension_semantics = [#tpu.dimension_semantics<parallel>, #tpu.dimension_semantics<arbitrary>], iteration_bounds = array<i64: 2, 1>, scalar_prefetch = 0 : i64, scratch_operands = 4 : i64, tpu.core_type = #tpu.core_type<tc>, window_params = [{transform_indices = @transform_0, window_bounds = array<i64: 8, 128>}, {transform_indices = @transform_1, window_bounds = array<i64: 8, 128>}, {transform_indices = @transform_2, window_bounds = array<i64: 1, 4, 128>}]} {
    %c0_i32 = arith.constant 0 : i32
    %0 = arith.cmpi eq, %arg1, %c0_i32 : i32
    %1 = arith.extui %0 : i1 to i32
    %c0_i32_0 = arith.constant 0 : i32
    %2 = arith.cmpi ne, %1, %c0_i32_0 : i32
    scf.if %2 {
      %cst_34 = arith.constant 0.000000e+00 : f32
      %56 = vector.broadcast %cst_34 : f32 to vector<8x128xf32>
      %c0_35 = arith.constant 0 : index
      %c0_36 = arith.constant 0 : index
      %57 = vector.load %arg5[%c0_35, %c0_36] : memref<8x128xf32, #tpu.memory_space<vmem>>, vector<8x128xf32>
      tpu.vector_store %arg5[%c0_35, %c0_36], %56 {strides = array<i32>} : memref<8x128xf32, #tpu.memory_space<vmem>>, vector<8x128xf32>,
      %cst_37 = arith.constant 0.000000e+00 : f32
      %58 = vector.broadcast %cst_37 : f32 to vector<8x128xf32>
      %c0_38 = arith.constant 0 : index
      %c0_39 = arith.constant 0 : index
      %59 = vector.load %arg6[%c0_38, %c0_39] : memref<8x128xf32, #tpu.memory_space<vmem>>, vector<8x128xf32>
      tpu.vector_store %arg6[%c0_38, %c0_39], %58 {strides = array<i32>} : memref<8x128xf32, #tpu.memory_space<vmem>>, vector<8x128xf32>,
      %cst_40 = arith.constant 0.000000e+00 : f32
      %60 = vector.broadcast %cst_40 : f32 to vector<8x128xf32>
      %c0_41 = arith.constant 0 : index
      %c0_42 = arith.constant 0 : index
      %61 = vector.load %arg7[%c0_41, %c0_42] : memref<8x128xf32, #tpu.memory_space<vmem>>, vector<8x128xf32>
      tpu.vector_store %arg7[%c0_41, %c0_42], %60 {strides = array<i32>} : memref<8x128xf32, #tpu.memory_space<vmem>>, vector<8x128xf32>,
      %cst_43 = arith.constant 0.000000e+00 : f32
      %62 = vector.broadcast %cst_43 : f32 to vector<8x128xf32>
      %c0_44 = arith.constant 0 : index
      %c0_45 = arith.constant 0 : index
      %63 = vector.load %arg8[%c0_44, %c0_45] : memref<8x128xf32, #tpu.memory_space<vmem>>, vector<8x128xf32>
      tpu.vector_store %arg8[%c0_44, %c0_45], %62 {strides = array<i32>} : memref<8x128xf32, #tpu.memory_space<vmem>>, vector<8x128xf32>,
    } else {
    }
    %c0 = arith.constant 0 : index
    %c0_1 = arith.constant 0 : index
    %3 = vector.load %arg2[%c0, %c0_1] : memref<8x128xf32, #tpu.memory_space<vmem>>, vector<8x128xf32>
    %cst = arith.constant -1.000000e+01 : f32
    %cst_2 = arith.constant 1.000000e+01 : f32
    %4 = vector.broadcast %cst : f32 to vector<8x128xf32>
    %5 = arith.maximumf %4, %3 : vector<8x128xf32>
    %6 = vector.broadcast %cst_2 : f32 to vector<8x128xf32>
    %7 = arith.minimumf %6, %5 : vector<8x128xf32>
    %c0_3 = arith.constant 0 : index
    %c0_4 = arith.constant 0 : index
    %8 = vector.load %arg3[%c0_3, %c0_4] : memref<8x128xf32, #tpu.memory_space<vmem>>, vector<8x128xf32>
    %9 = math.absf %7 : vector<8x128xf32>
    %cst_5 = arith.constant 0.000000e+00 : f32
    %10 = vector.broadcast %cst_5 : f32 to vector<8x128xf32>
    %11 = arith.subf %10, %9 : vector<8x128xf32>
    %12 = math.exp %11 : vector<8x128xf32>
    %13 = math.log1p %12 : vector<8x128xf32>
    %cst_6 = arith.constant 0.000000e+00 : f32
    %14 = vector.broadcast %cst_6 : f32 to vector<8x128xf32>
    %15 = arith.subf %14, %7 : vector<8x128xf32>
    %cst_7 = arith.constant 0.000000e+00 : f32
    %16 = vector.broadcast %cst_7 : f32 to vector<8x128xf32>
    %17 = arith.maximumf %15, %16 : vector<8x128xf32>
    %18 = arith.addf %13, %17 : vector<8x128xf32>
    %cst_8 = arith.constant 1.000000e+00 : f32
    %19 = vector.broadcast %cst_8 : f32 to vector<8x128xf32>
    %20 = arith.subf %19, %8 : vector<8x128xf32>
    %21 = arith.mulf %20, %7 : vector<8x128xf32>
    %22 = arith.addf %21, %18 : vector<8x128xf32>
    %23 = arith.mulf %8, %18 : vector<8x128xf32>
    %24 = arith.mulf %8, %7 : vector<8x128xf32>
    %25 = arith.addf %18, %24 : vector<8x128xf32>
    %cst_9 = arith.constant -1.750000e+00 : f32
    %26 = vector.broadcast %cst_9 : f32 to vector<8x128xf32>
    %27 = arith.mulf %26, %25 : vector<8x128xf32>
    %28 = math.exp %27 : vector<8x128xf32>
    %29 = arith.mulf %28, %22 : vector<8x128xf32>
    %30 = arith.mulf %28, %23 : vector<8x128xf32>
    %cst_10 = arith.constant 1.000000e+00 : f32
    %31 = vector.broadcast %cst_10 : f32 to vector<8x128xf32>
    %32 = arith.cmpf oeq, %8, %31 : vector<8x128xf32>
    %cst_11 = arith.constant 1.000000e+00 : f32
    %cst_12 = arith.constant 0.000000e+00 : f32
    %33 = vector.broadcast %cst_11 : f32 to vector<8x128xf32>
    %34 = vector.broadcast %cst_12 : f32 to vector<8x128xf32>
    %35 = arith.select %32, %33, %34 : vector<8x128xi1>, vector<8x128xf32>
    %cst_13 = arith.constant 0.000000e+00 : f32
    %36 = vector.broadcast %cst_13 : f32 to vector<8x128xf32>
    %37 = arith.cmpf oeq, %8, %36 : vector<8x128xf32>
    %cst_14 = arith.constant 1.000000e+00 : f32
    %cst_15 = arith.constant 0.000000e+00 : f32
    %38 = vector.broadcast %cst_14 : f32 to vector<8x128xf32>
    %39 = vector.broadcast %cst_15 : f32 to vector<8x128xf32>
    %40 = arith.select %37, %38, %39 : vector<8x128xi1>, vector<8x128xf32>
    %c0_16 = arith.constant 0 : index
    %c0_17 = arith.constant 0 : index
    %41 = vector.load %arg5[%c0_16, %c0_17] : memref<8x128xf32, #tpu.memory_space<vmem>>, vector<8x128xf32>
    %42 = arith.addf %41, %29 : vector<8x128xf32>
    %c0_18 = arith.constant 0 : index
    %c0_19 = arith.constant 0 : index
    %43 = vector.load %arg5[%c0_18, %c0_19] : memref<8x128xf32, #tpu.memory_space<vmem>>, vector<8x128xf32>
    tpu.vector_store %arg5[%c0_18, %c0_19], %42 {strides = array<i32>} : memref<8x128xf32, #tpu.memory_space<vmem>>, vector<8x128xf32>,
    %c0_20 = arith.constant 0 : index
    %c0_21 = arith.constant 0 : index
    %44 = vector.load %arg6[%c0_20, %c0_21] : memref<8x128xf32, #tpu.memory_space<vmem>>, vector<8x128xf32>
    %45 = arith.addf %44, %30 : vector<8x128xf32>
    %c0_22 = arith.constant 0 : index
    %c0_23 = arith.constant 0 : index
    %46 = vector.load %arg6[%c0_22, %c0_23] : memref<8x128xf32, #tpu.memory_space<vmem>>, vector<8x128xf32>
    tpu.vector_store %arg6[%c0_22, %c0_23], %45 {strides = array<i32>} : memref<8x128xf32, #tpu.memory_space<vmem>>, vector<8x128xf32>,
    %c0_24 = arith.constant 0 : index
    %c0_25 = arith.constant 0 : index
    %47 = vector.load %arg7[%c0_24, %c0_25] : memref<8x128xf32, #tpu.memory_space<vmem>>, vector<8x128xf32>
    %48 = arith.addf %47, %35 : vector<8x128xf32>
    %c0_26 = arith.constant 0 : index
    %c0_27 = arith.constant 0 : index
    %49 = vector.load %arg7[%c0_26, %c0_27] : memref<8x128xf32, #tpu.memory_space<vmem>>, vector<8x128xf32>
    tpu.vector_store %arg7[%c0_26, %c0_27], %48 {strides = array<i32>} : memref<8x128xf32, #tpu.memory_space<vmem>>, vector<8x128xf32>,
    %c0_28 = arith.constant 0 : index
    %c0_29 = arith.constant 0 : index
    %50 = vector.load %arg8[%c0_28, %c0_29] : memref<8x128xf32, #tpu.memory_space<vmem>>, vector<8x128xf32>
    %51 = arith.addf %50, %40 : vector<8x128xf32>
    %c0_30 = arith.constant 0 : index
    %c0_31 = arith.constant 0 : index
    %52 = vector.load %arg8[%c0_30, %c0_31] : memref<8x128xf32, #tpu.memory_space<vmem>>, vector<8x128xf32>
    tpu.vector_store %arg8[%c0_30, %c0_31], %51 {strides = array<i32>} : memref<8x128xf32, #tpu.memory_space<vmem>>, vector<8x128xf32>,
    %c0_i32_32 = arith.constant 0 : i32
    %53 = arith.cmpi eq, %arg1, %c0_i32_32 : i32
    %54 = arith.extui %53 : i1 to i32
    %c0_i32_33 = arith.constant 0 : i32
    %55 = arith.cmpi ne, %54, %c0_i32_33 : i32
    scf.if %55 {
      %c0_34 = arith.constant 0 : index
      %c0_35 = arith.constant 0 : index
      %56 = vector.load %arg5[%c0_34, %c0_35] : memref<8x128xf32, #tpu.memory_space<vmem>>, vector<8x128xf32>
      %cst_36 = arith.constant dense<0.000000e+00> : vector<128xf32>
      %57 = vector.multi_reduction <add>, %56, %cst_36 [0] : vector<8x128xf32> to vector<128xf32>
      %58 = vector.shape_cast %57 : vector<128xf32> to vector<1x128xf32>
      %c0_37 = arith.constant 0 : index
      %c0_38 = arith.constant 0 : index
      %c0_39 = arith.constant 0 : index
      %59 = vector.load %arg4[%c0_37, %c0_38, %c0_39] : memref<1x4x128xf32, #tpu.memory_space<vmem>>, vector<1x1x128xf32>
      %60 = vector.shape_cast %59 : vector<1x1x128xf32> to vector<1x128xf32>
      %61 = vector.shape_cast %58 : vector<1x128xf32> to vector<1x1x128xf32>
      tpu.vector_store %arg4[%c0_37, %c0_38, %c0_39], %61 {strides = array<i32>} : memref<1x4x128xf32, #tpu.memory_space<vmem>>, vector<1x1x128xf32>,
      %c0_40 = arith.constant 0 : index
      %c0_41 = arith.constant 0 : index
      %62 = vector.load %arg6[%c0_40, %c0_41] : memref<8x128xf32, #tpu.memory_space<vmem>>, vector<8x128xf32>
      %cst_42 = arith.constant dense<0.000000e+00> : vector<128xf32>
      %63 = vector.multi_reduction <add>, %62, %cst_42 [0] : vector<8x128xf32> to vector<128xf32>
      %64 = vector.shape_cast %63 : vector<128xf32> to vector<1x128xf32>
      %c0_43 = arith.constant 0 : index
      %c1 = arith.constant 1 : index
      %c0_44 = arith.constant 0 : index
      %65 = vector.load %arg4[%c0_43, %c1, %c0_44] : memref<1x4x128xf32, #tpu.memory_space<vmem>>, vector<1x1x128xf32>
      %66 = vector.shape_cast %65 : vector<1x1x128xf32> to vector<1x128xf32>
      %67 = vector.shape_cast %64 : vector<1x128xf32> to vector<1x1x128xf32>
      tpu.vector_store %arg4[%c0_43, %c1, %c0_44], %67 {strides = array<i32>} : memref<1x4x128xf32, #tpu.memory_space<vmem>>, vector<1x1x128xf32>,
      %c0_45 = arith.constant 0 : index
      %c0_46 = arith.constant 0 : index
      %68 = vector.load %arg7[%c0_45, %c0_46] : memref<8x128xf32, #tpu.memory_space<vmem>>, vector<8x128xf32>
      %cst_47 = arith.constant dense<0.000000e+00> : vector<128xf32>
      %69 = vector.multi_reduction <add>, %68, %cst_47 [0] : vector<8x128xf32> to vector<128xf32>
      %70 = vector.shape_cast %69 : vector<128xf32> to vector<1x128xf32>
      %c0_48 = arith.constant 0 : index
      %c2 = arith.constant 2 : index
      %c0_49 = arith.constant 0 : index
      %71 = vector.load %arg4[%c0_48, %c2, %c0_49] : memref<1x4x128xf32, #tpu.memory_space<vmem>>, vector<1x1x128xf32>
      %72 = vector.shape_cast %71 : vector<1x1x128xf32> to vector<1x128xf32>
      %73 = vector.shape_cast %70 : vector<1x128xf32> to vector<1x1x128xf32>
      tpu.vector_store %arg4[%c0_48, %c2, %c0_49], %73 {strides = array<i32>} : memref<1x4x128xf32, #tpu.memory_space<vmem>>, vector<1x1x128xf32>,
      %c0_50 = arith.constant 0 : index
      %c0_51 = arith.constant 0 : index
      %74 = vector.load %arg8[%c0_50, %c0_51] : memref<8x128xf32, #tpu.memory_space<vmem>>, vector<8x128xf32>
      %cst_52 = arith.constant dense<0.000000e+00> : vector<128xf32>
      %75 = vector.multi_reduction <add>, %74, %cst_52 [0] : vector<8x128xf32> to vector<128xf32>
      %76 = vector.shape_cast %75 : vector<128xf32> to vector<1x128xf32>
      %c0_53 = arith.constant 0 : index
      %c3 = arith.constant 3 : index
      %c0_54 = arith.constant 0 : index
      %77 = vector.load %arg4[%c0_53, %c3, %c0_54] : memref<1x4x128xf32, #tpu.memory_space<vmem>>, vector<1x1x128xf32>
      %78 = vector.shape_cast %77 : vector<1x1x128xf32> to vector<1x128xf32>
      %79 = vector.shape_cast %76 : vector<1x128xf32> to vector<1x1x128xf32>
      tpu.vector_store %arg4[%c0_53, %c3, %c0_54], %79 {strides = array<i32>} : memref<1x4x128xf32, #tpu.memory_space<vmem>>, vector<1x1x128xf32>,
    } else {
    }
    return
  }
  func.func @transform_0(%arg0: i32, %arg1: i32) -> (i32, i32) {
    %c1_i32 = arith.constant 1 : i32
    %0 = arith.muli %arg0, %c1_i32 : i32
    %1 = arith.addi %0, %arg1 : i32
    %c0_i32 = arith.constant 0 : i32
    %c0_i32_0 = arith.constant 0 : i32
    return %1, %c0_i32 : i32, i32
  }
  func.func @transform_1(%arg0: i32, %arg1: i32) -> (i32, i32) {
    %c1_i32 = arith.constant 1 : i32
    %0 = arith.muli %arg0, %c1_i32 : i32
    %1 = arith.addi %0, %arg1 : i32
    %c0_i32 = arith.constant 0 : i32
    %c0_i32_0 = arith.constant 0 : i32
    return %1, %c0_i32 : i32, i32
  }
  func.func @transform_2(%arg0: i32, %arg1: i32) -> (i32, i32, i32) {
    %c0_i32 = arith.constant 0 : i32
    %c0_i32_0 = arith.constant 0 : i32
    %c0_i32_1 = arith.constant 0 : i32
    return %arg0, %c0_i32, %c0_i32_0 : i32, i32, i32
  }
}

</mosaic_0001>

<llo_original>
// kernel: tpu_custom_call.1
$region0: #{tpu_custom_call.1}
  #allocation0 [shape = 'u32[]', space=smem, size = 0x4, offset = 0x4, fixed_abs, tag = 'smem constant byte address 0x4 - core index']
  #allocation1 [shape = 'u32[144,128]{1,0:T(1,128)}', space=vmem, size = 0x12000, scoped, tag = 'internal scratch']
  #allocation2 [shape = 'f32[8,128]{1,0:T(8,128)}', space=vmem, size = 0x1000, scoped, tag = 'scratch operand']
  #allocation3 [shape = 'f32[8,128]{1,0:T(8,128)}', space=vmem, size = 0x1000, scoped, tag = 'scratch operand']
  #allocation4 [shape = 'f32[8,128]{1,0:T(8,128)}', space=vmem, size = 0x1000, scoped, tag = 'scratch operand']
  #allocation5 [shape = 'f32[8,128]{1,0:T(8,128)}', space=vmem, size = 0x1000, scoped, tag = 'scratch operand']
  %s0 = inlined_call_operand.hbm [shape: f32[16,128], index: 0, kind: input, shape index: {}]
  %s1 = inlined_call_operand.hbm [shape: f32[16,128], index: 1, kind: input, shape index: {}]
  %s2 = inlined_call_operand.hbm [shape: f32[2,4,128], index: 2, kind: output, shape index: {}]
  %s3 = sld [smem:[#allocation0]]
  $region57: #{tpu_custom_call.1} parent=0
    _
  %s5 = ssub.s32 1, %s3
  %s6 = scalar_select 0, %s5, %s3
  $region1: #{tpu_custom_call.1} parent=0
    #allocation6 [shape = 'u8[8192]{0}', space=vmem, size = 0x2000, scoped, tag = 'input window, operand 0']
    #allocation7 [shape = 's32[2]{0}', space=sflag, size = 0x8, scoped, tag = 'scoped memory for tpu_custom_call.1']
    #allocation8 [shape = 's32[2]{0}', space=sflag, size = 0x8, scoped, tag = 'scoped memory for tpu_custom_call.1']
    #allocation9 [shape = 'u8[8192]{0}', space=vmem, size = 0x2000, scoped, tag = 'input window, operand 1']
    #allocation10 [shape = 's32[2]{0}', space=sflag, size = 0x8, scoped, tag = 'scoped memory for tpu_custom_call.1']
    #allocation11 [shape = 'u8[4096]{0}', space=vmem, size = 0x1000, scoped, tag = 'output window, operand 0']
    %7 = vsyncpa [#allocation7], 0
    %s8 = scalar_lea.sflag [#allocation7], 1
    %9 = vsyncpa %s8, 0
    %10 = vsyncpa [#allocation10], 0
    %s11 = scalar_lea.sflag [#allocation10], 1
    %12 = vsyncpa %s11, 0
    %13 = vsyncpa [#allocation8], 0
    %s14 = scalar_lea.sflag [#allocation8], 1
    %15 = vsyncpa %s14, 0
    loop: start=0, step=1, limit=4
    $region2: #{tpu_custom_call.1} parent=1 // loop_pre_header
      _
    $region3: #{tpu_custom_call.1} parent=1 // loop_header
      %s17 = sphi 0, %s21
      %p18 = scmp.ge.s32.totalorder %s17, 4
      %s24 = sphi 0, %s36
      %s25 = sphi 0, %s32
      %s26 = sphi 0, %s24
      %s27 = sphi 0, %s25
      %s28 = sphi 0, %s26
      %s29 = sphi 0, %s27
      %s41 = sphi 0, %s43
      %s44 = sphi 0, %s41
      %s45 = sphi 0, %s44
      %s61 = sphi 0, %s45
      %s69 = sphi 0, %s71
      %s72 = sphi 0, %s69
      %s73 = sphi 0, %s72
      %s89 = sphi 0, %s73
      %s95 = sphi 0, %s97
      %s98 = sphi 0, %s95
      %s99 = sphi 0, %s98
      %s115 = sphi 0, %s99
    $region4: #{tpu_custom_call.1} parent=1 // loop_header_branch
      %20 = sbr.rel (%p18) target = $region8
    $region5: #{tpu_custom_call.1} parent=1 // loop_body
      %s22 = ssub.s32 %s17, 1
      %s23 = ssub.s32 %s17, 2
      %s30 = sadd.s32 1, %s25
      %p31 = scmp.ge.s32.totalorder %s30, 1
      %s32 = scalar_select %p31, 0, %s30
      %s33 = sadd.s32 1, %s24
      %s34 = scalar_select %p31, %s33, %s24
      %p35 = scmp.ge.s32.totalorder %s34, 2
      %s36 = scalar_select %p35, 0, %s34
      %s37 = sadd.s32 %s24, %s25
      %s38 = sadd.s32 %s36, %s32
      %s39 = ssub.s32 %s37, %s38
      %p40 = scmp.eq.s32.totalorder %s39, 0
      %s42 = sadd.s32 %s41, 1
      %s43 = scalar_select %p40, %s41, %s42
      %p46 = pneg %p40
      %p47 = scmp.eq.s32.totalorder %s17, 1
      %p48 = por %p46, %p47
      %p49 = scmp.ne.s32.totalorder %s41, %s44
      %p50 = scmp.eq.s32.totalorder %s17, 0
      %p51 = por %p49, %p50
      %p52 = scmp.ne.s32.totalorder %s41, %s44
      %p53 = scmp.eq.s32.totalorder %s22, 1
      %p54 = por %p52, %p53
      %p55 = scmp.ne.s32.totalorder %s44, %s45
      %p56 = scmp.eq.s32.totalorder %s22, 0
      %p57 = por %p55, %p56
      %p58 = scmp.ne.s32.totalorder %s44, %s45
      %p59 = scmp.eq.s32.totalorder %s23, 1
      %p60 = por %p58, %p59
      %p62 = scmp.ne.s32.totalorder %s45, %s61
      %p63 = scmp.eq.s32.totalorder %s23, 0
      %p64 = por %p62, %p63
      %s65 = sadd.s32 %s24, %s25
      %s66 = sadd.s32 %s36, %s32
      %s67 = ssub.s32 %s65, %s66
      %p68 = scmp.eq.s32.totalorder %s67, 0
      %s70 = sadd.s32 %s69, 1
      %s71 = scalar_select %p68, %s69, %s70
      %p74 = pneg %p68
      %p75 = scmp.eq.s32.totalorder %s17, 1
      %p76 = por %p74, %p75
      %p77 = scmp.ne.s32.totalorder %s69, %s72
      %p78 = scmp.eq.s32.totalorder %s17, 0
      %p79 = por %p77, %p78
      %p80 = scmp.ne.s32.totalorder %s69, %s72
      %p81 = scmp.eq.s32.totalorder %s22, 1
      %p82 = por %p80, %p81
      %p83 = scmp.ne.s32.totalorder %s72, %s73
      %p84 = scmp.eq.s32.totalorder %s22, 0
      %p85 = por %p83, %p84
      %p86 = scmp.ne.s32.totalorder %s72, %s73
      %p87 = scmp.eq.s32.totalorder %s23, 1
      %p88 = por %p86, %p87
      %p90 = scmp.ne.s32.totalorder %s73, %s89
      %p91 = scmp.eq.s32.totalorder %s23, 0
      %p92 = por %p90, %p91
      %s93 = ssub.s32 %s24, %s36
      %p94 = scmp.eq.s32.totalorder %s93, 0
      %s96 = sadd.s32 %s95, 1
      %s97 = scalar_select %p94, %s95, %s96
      %p100 = pneg %p94
      %p101 = scmp.eq.s32.totalorder %s17, 1
      %p102 = por %p100, %p101
      %p103 = scmp.ne.s32.totalorder %s95, %s98
      %p104 = scmp.eq.s32.totalorder %s17, 0
      %p105 = por %p103, %p104
      %p106 = scmp.ne.s32.totalorder %s95, %s98
      %p107 = scmp.eq.s32.totalorder %s22, 1
      %p108 = por %p106, %p107
      %p109 = scmp.ne.s32.totalorder %s98, %s99
      %p110 = scmp.eq.s32.totalorder %s22, 0
      %p111 = por %p109, %p110
      %p112 = scmp.ne.s32.totalorder %s98, %s99
      %p113 = scmp.eq.s32.totalorder %s23, 1
      %p114 = por %p112, %p113
      %p116 = scmp.ne.s32.totalorder %s99, %s115
      %p117 = scmp.eq.s32.totalorder %s23, 0
      %p118 = por %p116, %p117
      %p119 = scmp.le.s32.totalorder 1, %s17
      %p120 = scmp.lt.s32.totalorder %s17, 3
      %p121 = pnand %p119, %p120
      %p122 = pneg %p121
      // Predicated region
      $region9: #{tpu_custom_call.1} parent=5 // pred_check
        _
      $region10: #{tpu_custom_call.1} parent=5 // pred_check_branch
        %124 = sbr.rel (%p121) target = $region12
      $region11: #{tpu_custom_call.1} parent=5 // pred_region
        %s125 = ssub.s32 %s17, 1
      $region12: #{tpu_custom_call.1} parent=5 // pred_fallthru
        _
      %p126 = scmp.lt.s32.totalorder %s17, 2
      // Predicated region
      $region13: #{tpu_custom_call.1} parent=5 // pred_check
        %p127 = pneg %p126
      $region14: #{tpu_custom_call.1} parent=5 // pred_check_branch
        %129 = sbr.rel (%p127) target = $region16
      $region15: #{tpu_custom_call.1} parent=5 // pred_region
        // Predicated region
        $region17: #{tpu_custom_call.1} parent=15 // pred_check
          %p130 = pneg %p51
        $region18: #{tpu_custom_call.1} parent=15 // pred_check_branch
          %132 = sbr.rel (%p130) target = $region20
        $region19: #{tpu_custom_call.1} parent=15 // pred_region
          %s133 = sand.u32 %s41, 1
          %s134 = scalar_lea.sflag [#allocation7], %s133
          %s135 = sand.u32 %s41, 1
          %s136 = smul.addr %s135, 8
          %s137 = scalar_lea.vmem [#allocation6], %s136
          %s138 = sadd.s32 %s24, %s25
          %s140 = ssub.s32 128, 128
          %141 = vsyncadd %s134, %s140
          %s142 = smul.addr %s138, 128
          %s143 = scalar_lea.hbm %s0, %s142
          %s145 = sshll.u32 %s137, 4
          %s146 = int_to_ptr.vmem [resolvable:$true] %s145
          %148 = dma.hbm_to_vmem [thread:$0]  %s143, 128, %s146, %s134
        $region20: #{tpu_custom_call.1} parent=15 // pred_fallthru
          _
        // Predicated region
        $region21: #{tpu_custom_call.1} parent=15 // pred_check
          %p149 = pneg %p79
        $region22: #{tpu_custom_call.1} parent=15 // pred_check_branch
          %151 = sbr.rel (%p149) target = $region24
        $region23: #{tpu_custom_call.1} parent=15 // pred_region
          %s152 = sand.u32 %s69, 1
          %s153 = scalar_lea.sflag [#allocation10], %s152
          %s154 = sand.u32 %s69, 1
          %s155 = smul.addr %s154, 8
          %s156 = scalar_lea.vmem [#allocation9], %s155
          %s157 = sadd.s32 %s24, %s25
          %s159 = ssub.s32 128, 128
          %160 = vsyncadd %s153, %s159
          %s161 = smul.addr %s157, 128
          %s162 = scalar_lea.hbm %s1, %s161
          %s164 = sshll.u32 %s156, 4
          %s165 = int_to_ptr.vmem [resolvable:$true] %s164
          %167 = dma.hbm_to_vmem [thread:$0]  %s162, 128, %s165, %s153
        $region24: #{tpu_custom_call.1} parent=15 // pred_fallthru
          _
      $region16: #{tpu_custom_call.1} parent=5 // pred_fallthru
        _
      %p168 = scmp.le.s32.totalorder 1, %s17
      %p169 = scmp.lt.s32.totalorder %s17, 3
      %p170 = pnand %p168, %p169
      %p171 = pneg %p170
      // Predicated region
      $region25: #{tpu_custom_call.1} parent=5 // pred_check
        _
      $region26: #{tpu_custom_call.1} parent=5 // pred_check_branch
        %173 = sbr.rel (%p170) target = $region28
      $region27: #{tpu_custom_call.1} parent=5 // pred_region
        %s174 = ssub.s32 %s17, 1
        %s175 = sand.u32 %s44, 1
        %s176 = scalar_lea.sflag [#allocation7], %s175
        %s177 = sand.u32 %s44, 1
        %s178 = smul.addr %s177, 8
        %s179 = scalar_lea.vmem [#allocation6], %s178
        // Predicated region
        $region29: #{tpu_custom_call.1} parent=27 // pred_check
          %p180 = pneg %p57
        $region30: #{tpu_custom_call.1} parent=27 // pred_check_branch
          %182 = sbr.rel (%p180) target = $region32
        $region31: #{tpu_custom_call.1} parent=27 // pred_region
          %183 = dma.done %s176, 128
        $region32: #{tpu_custom_call.1} parent=27 // pred_fallthru
          _
        %s184 = sand.u32 %s72, 1
        %s185 = scalar_lea.sflag [#allocation10], %s184
        %s186 = sand.u32 %s72, 1
        %s187 = smul.addr %s186, 8
        %s188 = scalar_lea.vmem [#allocation9], %s187
        // Predicated region
        $region33: #{tpu_custom_call.1} parent=27 // pred_check
          %p189 = pneg %p85
        $region34: #{tpu_custom_call.1} parent=27 // pred_check_branch
          %191 = sbr.rel (%p189) target = $region36
        $region35: #{tpu_custom_call.1} parent=27 // pred_region
          %192 = dma.done %s185, 128
        $region36: #{tpu_custom_call.1} parent=27 // pred_fallthru
          _
        %s193 = sand.u32 %s44, 1
        %s194 = scalar_lea.sflag [#allocation7], %s193
        %s195 = sand.u32 %s44, 1
        %s196 = smul.addr %s195, 8
        %s197 = scalar_lea.vmem [#allocation6], %s196
        %p198 = pneg %p57
        %p199 = pneg %p54
        %s200 = sand.u32 %s72, 1
        %s201 = scalar_lea.sflag [#allocation10], %s200
        %s202 = sand.u32 %s72, 1
        %s203 = smul.addr %s202, 8
        %s204 = scalar_lea.vmem [#allocation9], %s203
        %p205 = pneg %p85
        %p206 = pneg %p82
        %p207 = pneg %p111
        %p208 = pneg %p108
        %s209 = sand.u32 %s98, 1
        %s210 = scalar_lea.sflag [#allocation8], %s209
        %s211 = sand.u32 %s98, 1
        %s212 = smul.addr %s211, 4
        %s213 = scalar_lea.vmem [#allocation11], %s212
        %s214 = sadd.s32 %s26, %s27
        %s215 = sadd.s32 %s26, %s27
        %p216 = scmp.eq.s32.totalorder %s27, 0
        // Predicated region
        $region37: #{tpu_custom_call.1} parent=27 // pred_check
          %p217 = pneg %p216
        $region38: #{tpu_custom_call.1} parent=27 // pred_check_branch
          %219 = sbr.rel (%p217) target = $region40
        $region39: #{tpu_custom_call.1} parent=27 // pred_region
          %220 = vst [vmem:[#allocation2] sm:$0xff] 0.0
          %221 = vst [vmem:[#allocation3] sm:$0xff] 0.0
          %222 = vst [vmem:[#allocation4] sm:$0xff] 0.0
          %223 = vst [vmem:[#allocation5] sm:$0xff] 0.0
        $region40: #{tpu_custom_call.1} parent=27 // pred_fallthru
          _
        %v224 = vld [vmem:[%s179] sm:$0xff]
        %v225 = vmax.f32 %v224, -10.0
        %v226 = vmin.f32 %v225, 10.0
        %v227 = vld [vmem:[%s188] sm:$0xff]
        %v228 = vand.u32 2147483647, %v226
        %v229 = vsub.f32 0.0, %v228
        %v230 = vmul.f32 %v229, 1.442695
        %v231 = vpow.pop %v230
        %v232 = vadd.f32 %v231, 1.0
        %v233 = vlog2.pop %v232
        %v234 = vmul.f32 %v233, 0.6931472
        %v235 = vmul.f32 -0.5, %v231
        %v236 = vadd.f32 %v235, 1.0
        %v237 = vmul.f32 %v236, %v231
        %v238 = vand.u32 2147483647, %v231
        %vm239 = vcmp.lt.f32.partialorder %v238, 0.0004427343
        %v240 = vsel %vm239, %v237, %v234
        %v241 = vsub.f32 0.0, %v226
        %v242 = vmax.f32 %v241, 0.0
        %v243 = vadd.f32 %v240, %v242
        %v244 = vsub.f32 1.0, %v227
        %v245 = vmul.f32 %v244, %v226
        %v246 = vadd.f32 %v245, %v243
        %v247 = vmul.f32 %v227, %v243
        %v248 = vmul.f32 %v227, %v226
        %v249 = vadd.f32 %v243, %v248
        %v250 = vmul.f32 %v249, -1.75
        %v251 = vmul.f32 %v250, 1.442695
        %v252 = vpow.pop %v251
        %v253 = vmul.f32 %v252, %v246
        %v254 = vmul.f32 %v252, %v247
        %vm255 = vcmp.eq.f32.partialorder %v227, 1.0
        %v256 = vsel %vm255, 1.0, 0.0
        %vm257 = vcmp.eq.f32.partialorder %v227, 0.0
        %v258 = vsel %vm257, 1.0, 0.0
        %v259 = vld [vmem:[#allocation2] sm:$0xff]
        %v260 = vadd.f32 %v259, %v253
        %261 = vst [vmem:[#allocation2] sm:$0xff] %v260
        %v262 = vld [vmem:[#allocation3] sm:$0xff]
        %v263 = vadd.f32 %v262, %v254
        %264 = vst [vmem:[#allocation3] sm:$0xff] %v263
        %v265 = vld [vmem:[#allocation4] sm:$0xff]
        %v266 = vadd.f32 %v265, %v256
        %267 = vst [vmem:[#allocation4] sm:$0xff] %v266
        %v268 = vld [vmem:[#allocation5] sm:$0xff]
        %v269 = vadd.f32 %v268, %v258
        %270 = vst [vmem:[#allocation5] sm:$0xff] %v269
        // Predicated region
        $region41: #{tpu_custom_call.1} parent=27 // pred_check
          %p271 = pneg %p216
        $region42: #{tpu_custom_call.1} parent=27 // pred_check_branch
          %273 = sbr.rel (%p271) target = $region44
        $region43: #{tpu_custom_call.1} parent=27 // pred_region
          %v274 = vld [vmem:[#allocation2] sm:$0xff]
          %v275 = vrot.slane %v274, 4
          %v276 = vadd.f32 %v274, %v275
          %v277 = vrot.slane %v276, 2
          %v278 = vadd.f32 %v276, %v277
          %v279 = vrot.slane %v278, 1
          %v280 = vadd.f32 %v278, %v279
          %281 = vst [vmem:[%s213] sm:$0x1] %v280
          %v282 = vld [vmem:[#allocation3] sm:$0xff]
          %v283 = vrot.slane %v282, 4
          %v284 = vadd.f32 %v282, %v283
          %v285 = vrot.slane %v284, 2
          %v286 = vadd.f32 %v284, %v285
          %v287 = vrot.slane %v286, 1
          %v288 = vadd.f32 %v286, %v287
          %289 = vst [vmem:[%s213 + $0x1] sm:$0x1] %v288
          %v290 = vld [vmem:[#allocation4] sm:$0xff]
          %v291 = vrot.slane %v290, 4
          %v292 = vadd.f32 %v290, %v291
          %v293 = vrot.slane %v292, 2
          %v294 = vadd.f32 %v292, %v293
          %v295 = vrot.slane %v294, 1
          %v296 = vadd.f32 %v294, %v295
          %297 = vst [vmem:[%s213 + $0x2] sm:$0x1] %v296
          %v298 = vld [vmem:[#allocation5] sm:$0xff]
          %v299 = vrot.slane %v298, 4
          %v300 = vadd.f32 %v298, %v299
          %v301 = vrot.slane %v300, 2
          %v302 = vadd.f32 %v300, %v301
          %v303 = vrot.slane %v302, 1
          %v304 = vadd.f32 %v302, %v303
          %305 = vst [vmem:[%s213 + $0x3] sm:$0x1] %v304
        $region44: #{tpu_custom_call.1} parent=27 // pred_fallthru
          _
        %s306 = sand.u32 %s98, 1
        %s307 = scalar_lea.sflag [#allocation8], %s306
        %s308 = sand.u32 %s98, 1
        %s309 = smul.addr %s308, 4
        %s310 = scalar_lea.vmem [#allocation11], %s309
        // Predicated region
        $region45: #{tpu_custom_call.1} parent=27 // pred_check
          %p311 = pneg %p108
        $region46: #{tpu_custom_call.1} parent=27 // pred_check_branch
          %313 = sbr.rel (%p311) target = $region48
        $region47: #{tpu_custom_call.1} parent=27 // pred_region
          %s315 = ssub.s32 64, 64
          %316 = vsyncadd %s307, %s315
          %s317 = smul.addr %s26, 64
          %s318 = scalar_lea.hbm %s2, %s317
          %s320 = sshll.u32 %s310, 4
          %s321 = int_to_ptr.vmem [resolvable:$true] %s320
          %323 = dma.vmem_to_hbm [thread:$0]  %s321, 64, %s318, %s307
        $region48: #{tpu_custom_call.1} parent=27 // pred_fallthru
          _
      $region28: #{tpu_custom_call.1} parent=5 // pred_fallthru
        _
      %p324 = scmp.le.s32.totalorder 2, %s17
      // Predicated region
      $region49: #{tpu_custom_call.1} parent=5 // pred_check
        %p325 = pneg %p324
      $region50: #{tpu_custom_call.1} parent=5 // pred_check_branch
        %327 = sbr.rel (%p325) target = $region52
      $region51: #{tpu_custom_call.1} parent=5 // pred_region
        %s328 = ssub.s32 %s17, 2
        // Predicated region
        $region53: #{tpu_custom_call.1} parent=51 // pred_check
          %p329 = pneg %p114
        $region54: #{tpu_custom_call.1} parent=51 // pred_check_branch
          %331 = sbr.rel (%p329) target = $region56
        $region55: #{tpu_custom_call.1} parent=51 // pred_region
          %s332 = sand.u32 %s99, 1
          %s333 = scalar_lea.sflag [#allocation8], %s332
          %s334 = sand.u32 %s99, 1
          %s335 = smul.addr %s334, 4
          %s336 = scalar_lea.vmem [#allocation11], %s335
          %337 = dma.done %s333, 64
        $region56: #{tpu_custom_call.1} parent=51 // pred_fallthru
          _
      $region52: #{tpu_custom_call.1} parent=5 // pred_fallthru
        _
    $region6: #{tpu_custom_call.1} parent=1 // loop_footer
      %s21 = sadd.s32 1, %s17
    $region7: #{tpu_custom_call.1} parent=1 // loop_footer_branch
      %16 = sbr.rel target = $region3
    $region8: #{tpu_custom_call.1} parent=1 // loop_exit
      _
    %338 = vsyncpa [#allocation7], 1
    %s339 = scalar_lea.sflag [#allocation7], 1
    %340 = vsyncpa %s339, 1
    %341 = vsyncpa [#allocation10], 1
    %s342 = scalar_lea.sflag [#allocation10], 1
    %343 = vsyncpa %s342, 1
    %344 = vsyncpa [#allocation8], 1
    %s345 = scalar_lea.sflag [#allocation8], 1
    %346 = vsyncpa %s345, 1

</llo_original>
